<compile_context>
chip_gen: v7x
topology: tpu7x:2x2x1
jax: 0.10.0
libtpu: 0.0.40
codegen_flags: <defaults>
</compile_context>

<pallas_src>
import jax
import jax.numpy as jnp
from jax.experimental import pallas as pl
from jax.experimental.pallas import tpu as pltpu


def _round_up(x, m):
    return ((x + m - 1) // m) * m


def _round_down(x, m):
    return (x // m) * m


def _fbn_affine_kernel(x_ref, scale_ref, shift_ref, o_ref):
    # y = x * scale + shift in fp32, cast back to the input dtype on store.
    # scale/shift broadcast either per-row (tm, 1) or per-lane (1, tl)
    # depending on which view the wrapper chose.
    x = x_ref[...].astype(jnp.float32)
    o_ref[...] = (x * scale_ref[...] + shift_ref[...]).astype(o_ref.dtype)


def _tpu_budget():
    """Generation-aware (num_tensorcores, default_block_bytes, vmem_cap_bytes)."""
    gen = None
    try:
        kind = jax.devices()[0].device_kind.lower()
        for g in (7, 6, 5, 4):
            if f"v{g}" in kind or f"tpu{g}" in kind:
                gen = g
                break
    except Exception:
        gen = None
    if gen == 7:   # 64 MiB VMEM/TC, 2 TCs, ~3.2 TB/s HBM: bigger blocks, tight cap.
        return 2, 8 << 20, 48 << 20
    if gen == 6:   # 128 MiB VMEM, 1 TC: large blocks are free.
        return 1, 10 << 20, 96 << 20
    if gen == 5:   # 128 MiB VMEM, 1 TC, scoped default only 16 MiB: 4 MiB blocks.
        return 1, 4 << 20, 96 << 20
    return 1, 4 << 20, 64 << 20


def _pick_tiles(rows, lanes, itemsize, sub, block_bytes, vmem_cap, num_cores,
                param_tile_bytes):
    """Pick a (t_rows, t_lanes) block for a (rows, lanes) array.

    Sizing uses the *padded* VMEM footprint (lanes round up to 128, sublanes to
    the dtype packing `sub`).  `param_tile_bytes(rows_pad, lanes_pad)` returns
    the padded bytes of one buffer-set of the scale+shift tiles.
    Returns (t_rows, t_lanes, vmem_bytes_needed).
    """
    max_lanes = max(128, _round_down(block_bytes // (sub * itemsize), 128))
    tl = lanes if _round_up(lanes, 128) <= max_lanes else max_lanes
    tl_pad = _round_up(tl, 128)

    rows_budget = max(sub, block_bytes // max(1, tl_pad * itemsize))
    tm = rows if rows < sub else min(rows, _round_down(rows_budget, sub))

    # v7x has 2 TensorCores: make sure the 'parallel' grid has >= 2 blocks.
    if num_cores >= 2 and pl.cdiv(rows, tm) * pl.cdiv(lanes, tl) < 2:
        if rows >= 2 * sub:
            tm = _round_up(pl.cdiv(rows, 2), sub)
        elif lanes > 128:
            tl = max(128, _round_up(pl.cdiv(lanes, 2), 128))

    def needed(tm_, tl_):
        rp, lp = _round_up(tm_, sub), _round_up(tl_, 128)
        x_tile = rp * lp * itemsize
        # double-buffered (in + out) x tiles + double-buffered params + slack
        return 4 * x_tile + 2 * param_tile_bytes(rp, lp) + (4 << 20)

    # Shrink (rows first, then lanes) until the padded footprint fits the cap.
    while needed(tm, tl) > vmem_cap and tm > sub:
        tm = max(sub, _round_down(tm // 2, sub))
    while needed(tm, tl) > vmem_cap and tl > 128:
        tl = max(128, _round_down(tl // 2, 128))

    return tm, tl, needed(tm, tl)


def frozen_batch_norm_2d(x_nchw, weight, bias, running_mean, running_var,
                         eps=1e-5, *, block_bytes=None, vmem_limit_bytes=None,
                         small_hw_bytes=512):
    """FrozenBatchNorm2d forward over an NCHW tensor."""
    N, C, H, W = x_nchw.shape
    dtype = x_nchw.dtype
    itemsize = jnp.dtype(dtype).itemsize
    sub = {4: 8, 2: 16, 1: 32}.get(itemsize, 8)   # sublane packing granularity
    HW = H * W

    num_cores, default_block, vmem_cap = _tpu_budget()
    if block_bytes is None:
        block_bytes = default_block

    # Per-channel affine params, precomputed once in fp32 (PyTorch keeps fp32
    # buffers even for bf16 activations).
    scale = weight.astype(jnp.float32) * jax.lax.rsqrt(
        running_var.astype(jnp.float32) + jnp.float32(eps))            # (C,)
    shift = bias.astype(jnp.float32) - running_mean.astype(jnp.float32) * scale

    if HW * itemsize >= small_hw_bytes:
        # ---- Large-HW path: (N*C, H*W) view, per-row params. ----
        NC = N * C
        x2 = x_nchw.reshape(NC, HW)
        scale_in = jnp.tile(scale, N).reshape(NC, 1)
        shift_in = jnp.tile(shift, N).reshape(NC, 1)

        # Each (tm, 1) fp32 param tile pads to (round_up(tm, 8), 128) in VMEM.
        param_bytes = lambda rp, lp: 2 * _round_up(rp, 8) * 128 * 4
        tm, tl, vmem_needed = _pick_tiles(NC, HW, itemsize, sub, block_bytes,
                                          vmem_cap, num_cores, param_bytes)
        # Lane blocks innermost: the (i, 0) param tiles stay resident across
        # the fast axis (no re-fetch).  Do not reorder.
        grid = (pl.cdiv(NC, tm), pl.cdiv(HW, tl))
        in_specs = [
            pl.BlockSpec((tm, tl), lambda i, j: (i, j)),
            pl.BlockSpec((tm, 1), lambda i, j: (i, 0)),
            pl.BlockSpec((tm, 1), lambda i, j: (i, 0)),
        ]
        out_spec = pl.BlockSpec((tm, tl), lambda i, j: (i, j))
        out_shape2 = (NC, HW)
    else:
        # ---- Small-HW path: (N, C*H*W) view, per-element lane params. ----
        CHW = C * HW
        x2 = x_nchw.reshape(N, CHW)
        scale_in = jnp.repeat(scale, HW).reshape(1, CHW)
        shift_in = jnp.repeat(shift, HW).reshape(1, CHW)

        # Each (1, tl) fp32 param tile pads to (8, round_up(tl, 128)) in VMEM.
        param_bytes = lambda rp, lp: 2 * 8 * lp * 4
        tn, tl, vmem_needed = _pick_tiles(N, CHW, itemsize, sub, block_bytes,
                                          vmem_cap, num_cores, param_bytes)
        # Row blocks innermost: the (0, j) param tiles stay resident across
        # the fast axis (no re-fetch).
        grid = (pl.cdiv(CHW, tl), pl.cdiv(N, tn))
        in_specs = [
            pl.BlockSpec((tn, tl), lambda j, i: (i, j)),
            pl.BlockSpec((1, tl), lambda j, i: (0, j)),
            pl.BlockSpec((1, tl), lambda j, i: (0, j)),
        ]
        out_spec = pl.BlockSpec((tn, tl), lambda j, i: (i, j))
        out_shape2 = (N, CHW)

    if vmem_limit_bytes is None:
        vmem_limit_bytes = int(min(vmem_cap, max(32 << 20, vmem_needed)))

    out2 = pl.pallas_call(
        _fbn_affine_kernel,
        out_shape=jax.ShapeDtypeStruct(out_shape2, dtype),
        grid=grid,
        in_specs=in_specs,
        out_specs=out_spec,
        compiler_params=pltpu.CompilerParams(
            dimension_semantics=("parallel", "parallel"),
            vmem_limit_bytes=vmem_limit_bytes),
    )(x2, scale_in, shift_in)

    # TODO(synk): the reshapes are zero-copy only if XLA keeps x in row-major
    # NCHW layout; a different producer layout adds an HBM copy outside the
    # kernel (dominates wall time for this bandwidth-bound op).
    return out2.reshape(N, C, H, W)


def _reference(x, weight, bias, running_mean, running_var, eps):
    # Pure-JAX mirror of the PyTorch forward (fp32 buffers, cast at the end).
    w = weight.astype(jnp.float32).reshape(1, -1, 1, 1)
    b = bias.astype(jnp.float32).reshape(1, -1, 1, 1)
    rv = running_var.astype(jnp.float32).reshape(1, -1, 1, 1)
    rm = running_mean.astype(jnp.float32).reshape(1, -1, 1, 1)
    scale = w * jax.lax.rsqrt(rv + jnp.float32(eps))
    bias_ = b - rm * scale
    return (x.astype(jnp.float32) * scale + bias_).astype(x.dtype)


if __name__ == "__main__":
    key = jax.random.PRNGKey(0)
    eps = 1e-5

    # Test 1: fp32, spec-consistent small shape (large-HW path).
    N, C, H, W = 2, 4, 16, 16
    kx, kw, kb, km, kv = jax.random.split(key, 5)
    x = jax.random.normal(kx, (N, C, H, W), dtype=jnp.float32)
    weight = jax.random.normal(kw, (C,), dtype=jnp.float32) * 0.1 + 1.0
    bias = jax.random.normal(kb, (C,), dtype=jnp.float32) * 0.1
    running_mean = jax.random.normal(km, (C,), dtype=jnp.float32) * 0.1
    running_var = jax.random.uniform(kv, (C,), dtype=jnp.float32,
                                     minval=0.5, maxval=1.5)

    out = frozen_batch_norm_2d(x, weight, bias, running_mean, running_var, eps)
    out = jax.block_until_ready(out)
    ref = _reference(x, weight, bias, running_mean, running_var, eps)
    assert out.shape == (N, C, H, W)
    assert jnp.allclose(out, ref, atol=1e-5, rtol=1e-5)

    # Test 2: bf16 input with odd small spatial dims (small-HW lane-dense path).
    N2, C2, H2, W2 = 2, 3, 7, 9
    k2 = jax.random.split(key, 6)
    x_b = jax.random.normal(k2[0], (N2, C2, H2, W2),
                            dtype=jnp.float32).astype(jnp.bfloat16)
    w_b = jax.random.normal(k2[1], (C2,), dtype=jnp.float32) * 0.1 + 1.0
    b_b = jax.random.normal(k2[2], (C2,), dtype=jnp.float32) * 0.1
    m_b = jax.random.normal(k2[3], (C2,), dtype=jnp.float32) * 0.1
    v_b = jax.random.uniform(k2[4], (C2,), dtype=jnp.float32,
                             minval=0.5, maxval=1.5)

    out_b = frozen_batch_norm_2d(x_b, w_b, b_b, m_b, v_b, eps)
    out_b = jax.block_until_ready(out_b)
    ref_b = _reference(x_b, w_b, b_b, m_b, v_b, eps)
    assert out_b.shape == (N2, C2, H2, W2)
    assert out_b.dtype == jnp.bfloat16
    assert jnp.allclose(out_b.astype(jnp.float32), ref_b.astype(jnp.float32),
                        atol=2e-2, rtol=2e-2)

    # Test 3: fp32, ragged shapes (NC not multiple of 8, HW not multiple of 128).
    N3, C3, H3, W3 = 2, 5, 20, 20
    k3 = jax.random.split(key, 7)
    x_c = jax.random.normal(k3[0], (N3, C3, H3, W3), dtype=jnp.float32)
    w_c = jax.random.normal(k3[1], (C3,), dtype=jnp.float32) * 0.1 + 1.0
    b_c = jax.random.normal(k3[2], (C3,), dtype=jnp.float32) * 0.1
    m_c = jax.random.normal(k3[3], (C3,), dtype=jnp.float32) * 0.1
    v_c = jax.random.uniform(k3[4], (C3,), dtype=jnp.float32,
                             minval=0.5, maxval=1.5)

    out_c = frozen_batch_norm_2d(x_c, w_c, b_c, m_c, v_c, eps)
    out_c = jax.block_until_ready(out_c)
    ref_c = _reference(x_c, w_c, b_c, m_c, v_c, eps)
    assert out_c.shape == (N3, C3, H3, W3)
    assert jnp.allclose(out_c, ref_c, atol=1e-5, rtol=1e-5)

    print("KERNEL_OK")
</pallas_src>

<mosaic_0001>
module attributes {stable_mosaic.version = 11 : i64} {
  func.func @_fbn_affine_kernel(%arg0: i32, %arg1: i32, %arg2: memref<8x256xf32, #tpu.memory_space<vmem>>, %arg3: memref<8x1xf32, #tpu.memory_space<vmem>>, %arg4: memref<8x1xf32, #tpu.memory_space<vmem>>, %arg5: memref<8x256xf32, #tpu.memory_space<vmem>>) attributes {dimension_semantics = [#tpu.dimension_semantics<parallel>, #tpu.dimension_semantics<parallel>], iteration_bounds = array<i64: 1, 1>, scalar_prefetch = 0 : i64, scratch_operands = 0 : i64, tpu.core_type = #tpu.core_type<tc>, window_params = [{transform_indices = @transform_0, window_bounds = array<i64: 8, 256>}, {transform_indices = @transform_1, window_bounds = array<i64: 8, 1>}, {transform_indices = @transform_2, window_bounds = array<i64: 8, 1>}, {transform_indices = @transform_3, window_bounds = array<i64: 8, 256>}]} {
    %c0 = arith.constant 0 : index
    %c0_0 = arith.constant 0 : index
    %0 = vector.load %arg2[%c0, %c0_0] : memref<8x256xf32, #tpu.memory_space<vmem>>, vector<8x256xf32>
    %c0_1 = arith.constant 0 : index
    %c0_2 = arith.constant 0 : index
    %1 = vector.load %arg3[%c0_1, %c0_2] : memref<8x1xf32, #tpu.memory_space<vmem>>, vector<8x1xf32>
    %2 = vector.broadcast %1 : vector<8x1xf32> to vector<8x256xf32>
    %3 = arith.mulf %0, %2 : vector<8x256xf32>
    %c0_3 = arith.constant 0 : index
    %c0_4 = arith.constant 0 : index
    %4 = vector.load %arg4[%c0_3, %c0_4] : memref<8x1xf32, #tpu.memory_space<vmem>>, vector<8x1xf32>
    %5 = vector.broadcast %4 : vector<8x1xf32> to vector<8x256xf32>
    %6 = arith.addf %3, %5 : vector<8x256xf32>
    %c0_5 = arith.constant 0 : index
    %c0_6 = arith.constant 0 : index
    %7 = vector.load %arg5[%c0_5, %c0_6] : memref<8x256xf32, #tpu.memory_space<vmem>>, vector<8x256xf32>
    tpu.vector_store %arg5[%c0_5, %c0_6], %6 {strides = array<i32>} : memref<8x256xf32, #tpu.memory_space<vmem>>, vector<8x256xf32>,
    return
  }
  func.func @transform_0(%arg0: i32, %arg1: i32) -> (i32, i32) {
    %c0_i32 = arith.constant 0 : i32
    return %arg0, %arg1 : i32, i32
  }
  func.func @transform_1(%arg0: i32, %arg1: i32) -> (i32, i32) {
    %c0_i32 = arith.constant 0 : i32
    %c0_i32_0 = arith.constant 0 : i32
    return %arg0, %c0_i32 : i32, i32
  }
  func.func @transform_2(%arg0: i32, %arg1: i32) -> (i32, i32) {
    %c0_i32 = arith.constant 0 : i32
    %c0_i32_0 = arith.constant 0 : i32
    return %arg0, %c0_i32 : i32, i32
  }
  func.func @transform_3(%arg0: i32, %arg1: i32) -> (i32, i32) {
    %c0_i32 = arith.constant 0 : i32
    return %arg0, %arg1 : i32, i32
  }
}

</mosaic_0001>

<llo_original>
// kernel: tpu_custom_call.1
$region0: #{tpu_custom_call.1}
  #allocation0 [shape = 'u32[]', space=smem, size = 0x4, offset = 0x4, fixed_abs, tag = 'smem constant byte address 0x4 - core index']
  #allocation1 [shape = 'u32[144,128]{1,0:T(1,128)}', space=vmem, size = 0x12000, scoped, tag = 'internal scratch']
  %s0 = inlined_call_operand.vmem [shape: f32[8,256], index: 0, kind: input, shape index: {}]
  %s1 = inlined_call_operand.vmem [shape: f32[8,1], index: 1, kind: input, shape index: {}]
  %s2 = inlined_call_operand.vmem [shape: f32[8,1], index: 2, kind: input, shape index: {}]
  %s3 = inlined_call_operand.hbm [shape: f32[8,256], index: 3, kind: output, shape index: {}]
  %s4 = sld [smem:[#allocation0]]
  $region22: #{tpu_custom_call.1} parent=0
    _
  %s6 = ssub.s32 1, %s4
  %s7 = scalar_select 0, %s6, %s4
  $region1: #{tpu_custom_call.1} parent=0
    #allocation2 [shape = 'u8[8192]{0}', space=vmem, size = 0x2000, scoped, tag = 'output window, operand 0, single buffered']
    #allocation3 [shape = 's32[1]{0}', space=sflag, size = 0x4, scoped, tag = 'scoped memory for tpu_custom_call.1']
    %8 = vsyncpa [#allocation3], 0
    // Predicated region
    $region2: #{tpu_custom_call.1} parent=1 // pred_check
      _
    $region3: #{tpu_custom_call.1} parent=1 // pred_check_branch
      %10 = sbr.rel (0) target = $region5
    $region4: #{tpu_custom_call.1} parent=1 // pred_region
      _
    $region5: #{tpu_custom_call.1} parent=1 // pred_fallthru
      _
    // Predicated region
    $region6: #{tpu_custom_call.1} parent=1 // pred_check
      _
    $region7: #{tpu_custom_call.1} parent=1 // pred_check_branch
      %12 = sbr.rel (0) target = $region9
    $region8: #{tpu_custom_call.1} parent=1 // pred_region
      _
    $region9: #{tpu_custom_call.1} parent=1 // pred_fallthru
      _
    // Predicated region
    $region10: #{tpu_custom_call.1} parent=1 // pred_check
      _
    $region11: #{tpu_custom_call.1} parent=1 // pred_check_branch
      %14 = sbr.rel (0) target = $region13
    $region12: #{tpu_custom_call.1} parent=1 // pred_region
      _
    $region13: #{tpu_custom_call.1} parent=1 // pred_fallthru
      _
    %v15 = vld [vmem:[%s0] sm:$0xff]
    %v16 = vld [vmem:[%s0 + $0x8] sm:$0xff]
    %v17 = vld [vmem:[%s1] sm:$0xff]
    %19 = vset.pattern.permute.xlu0 0
    %20 = vperm.xlu0 %19, %v17
    %v21 = vpop.permute.xlu0 %20
    %v23 = vmul.f32 %v15, %v21
    %v24 = vmul.f32 %v16, %v21
    %v25 = vld [vmem:[%s2] sm:$0xff]
    %27 = vset.pattern.permute.xlu0 0
    %28 = vperm.xlu0 %27, %v25
    %v29 = vpop.permute.xlu0 %28
    %v31 = vadd.f32 %v23, %v29
    %v32 = vadd.f32 %v24, %v29
    %33 = vst [vmem:[#allocation2] sm:$0xff] %v31
    %34 = vst [vmem:[#allocation2 + $0x8] sm:$0xff] %v32
    // Predicated region
    $region14: #{tpu_custom_call.1} parent=1 // pred_check
      _
    $region15: #{tpu_custom_call.1} parent=1 // pred_check_branch
      %36 = sbr.rel (0) target = $region17
    $region16: #{tpu_custom_call.1} parent=1 // pred_region
      %s38 = ssub.s32 256, 256
      %39 = vsyncadd [#allocation3], %s38
      %s41 = sshll.u32 [#allocation2], 4
      %s42 = int_to_ptr.vmem [resolvable:$true] %s41
      %44 = dma.vmem_to_hbm [thread:$0]  %s42, 256, %s3, [#allocation3]
    $region17: #{tpu_custom_call.1} parent=1 // pred_fallthru
      _
    // Predicated region
    $region18: #{tpu_custom_call.1} parent=1 // pred_check
      _
    $region19: #{tpu_custom_call.1} parent=1 // pred_check_branch
      %46 = sbr.rel (0) target = $region21
    $region20: #{tpu_custom_call.1} parent=1 // pred_region
      %47 = dma.done [#allocation3], 256
    $region21: #{tpu_custom_call.1} parent=1 // pred_fallthru
      _
    %48 = vsyncpa [#allocation3], 1

</llo_original>
